<compile_context>
chip_gen: v7x
topology: tpu7x:2x2x1
jax: 0.10.0
libtpu: 0.0.40
codegen_flags: <defaults>
</compile_context>

<pallas_src>
import jax
import jax.numpy as jnp
from jax.experimental import pallas as pl
from jax.experimental.pallas import tpu as pltpu


def _round_up(n, m):
    return (n + m - 1) // m * m


def _ffn_kernel(x_ref, w1_ref, b1_ref, w2_ref, b2_ref, o_ref):
    # x_ref: (tm, dm), w1_ref: (dm, df), b1_ref: (1, df),
    # w2_ref: (df, dm), b2_ref: (1, dm), o_ref: (tm, dm)
    x = x_ref[...]
    # Linear1 (+bias) with f32 accumulation on the MXU.
    h = jnp.dot(x, w1_ref[...], preferred_element_type=jnp.float32)
    h = h + b1_ref[...].astype(jnp.float32)
    # LeakyReLU (PyTorch default negative_slope = 0.01). For slope < 1,
    # max(h, slope*h) == leaky_relu(h); one VPU op instead of cmp+select.
    h = jnp.maximum(h, 0.01 * h)
    # TODO(synk): Dropout with p=0 is the identity; non-zero p would need
    # pltpu.prng_seed / pltpu.prng_random_bits masking.
    # Feed the second matmul in the weights' dtype (enables the bf16 MXU path when
    # bf16 weights are supplied); accumulation stays f32 either way.
    h = h.astype(w2_ref.dtype)
    o = jnp.dot(h, w2_ref[...], preferred_element_type=jnp.float32)
    o = o + b2_ref[...].astype(jnp.float32)
    o_ref[...] = o.astype(o_ref.dtype)


def atom_feed_forward(x, w1, b1, w2, b2, *, tm=256):
    """AtomFeedForward forward pass.

    x: (B, S, d_model); w1: (d_model, d_forward); b1: (d_forward,);
    w2: (d_forward, d_model); b2: (d_model,).
    Weights are the transposed PyTorch layout so the kernel does x @ W + b.
    """
    B, S, d_model = x.shape
    d_forward = w1.shape[1]
    M = B * S
    dtype = x.dtype
    itemsize = dtype.itemsize

    # --- Shape planning -----------------------------------------------------
    # Lane-dense feature dims (multiples of 128) avoid masked vst partial stores and
    # keep MXU result tiles full. Zero padding preserves the math exactly.
    dm_p = _round_up(d_model, 128)
    df_p = _round_up(d_forward, 128)
    # Large sublane-aligned row tile (MXU rows + fewer grid steps), capped at the padded
    # row count so toy shapes collapse to a single grid step.
    sub = 8 if itemsize >= 4 else 16
    tm = max(sub, min(_round_up(tm, sub), _round_up(M, sub)))
    M_p = _round_up(M, tm)

    # Only materialize pads when actually needed (no extra HBM copies on aligned shapes).
    x2d = x.reshape(M, d_model)
    if M_p != M or dm_p != d_model:
        x2d = jnp.pad(x2d, ((0, M_p - M), (0, dm_p - d_model)))
    w1p = jnp.pad(w1, ((0, dm_p - d_model), (0, df_p - d_forward))) \
        if (dm_p != d_model or df_p != d_forward) else w1
    w2p = jnp.pad(w2, ((0, df_p - d_forward), (0, dm_p - d_model))) \
        if (dm_p != d_model or df_p != d_forward) else w2
    b1p = (jnp.pad(b1, (0, df_p - d_forward)) if df_p != d_forward else b1).reshape(1, df_p)
    b2p = (jnp.pad(b2, (0, dm_p - d_model)) if dm_p != d_model else b2).reshape(1, dm_p)

    grid = (M_p // tm,)

    # VMEM budget: double-buffered x/out tiles + weights/biases + f32 intermediates;
    # give 2x headroom, clamp to [32 MiB, 64 MiB] (64 MiB = v7x physical VMEM).
    vmem_bytes = (
        2 * 2 * tm * dm_p * itemsize
        + (dm_p * df_p + df_p * dm_p + df_p + dm_p) * itemsize
        + tm * df_p * 4
        + tm * dm_p * 4
    )
    vmem_limit = int(min(max(2 * vmem_bytes, 32 * 1024 * 1024), 64 * 1024 * 1024))

    cost = pl.CostEstimate(
        flops=4 * M_p * dm_p * df_p,  # two matmuls
        transcendentals=0,
        bytes_accessed=(2 * M_p * dm_p + 2 * dm_p * df_p + dm_p + df_p) * itemsize,
    )

    # NOTE: both weight matrices are kept fully VMEM-resident here. For very large
    # d_model/d_forward (esp. on v7x's 64 MiB VMEM) add a d_forward reduction grid axis
    # marked "arbitrary" with an f32 VMEM accumulator (standard P3 pattern) instead.
    def build(single_buffer_weights):
        const_kw = {}
        if single_buffer_weights:
            # Weights/biases are grid-invariant (constant index_map): one buffer is enough.
            const_kw = dict(pipeline_mode=pl.Buffered(1))
        grid_spec = pltpu.PrefetchScalarGridSpec(
            num_scalar_prefetch=0,
            grid=grid,
            in_specs=[
                pl.BlockSpec((tm, dm_p), lambda i: (i, 0)),
                pl.BlockSpec((dm_p, df_p), lambda i: (0, 0), **const_kw),
                pl.BlockSpec((1, df_p), lambda i: (0, 0), **const_kw),
                pl.BlockSpec((df_p, dm_p), lambda i: (0, 0), **const_kw),
                pl.BlockSpec((1, dm_p), lambda i: (0, 0), **const_kw),
            ],
            out_specs=pl.BlockSpec((tm, dm_p), lambda i: (i, 0)),
        )
        return pl.pallas_call(
            _ffn_kernel,
            out_shape=jax.ShapeDtypeStruct((M_p, dm_p), dtype),
            grid_spec=grid_spec,
            compiler_params=pltpu.CompilerParams(
                dimension_semantics=("parallel",),
                vmem_limit_bytes=vmem_limit,
            ),
            cost_estimate=cost,
        )

    try:
        out2d = build(single_buffer_weights=True)(x2d, w1p, b1p, w2p, b2p)
    except Exception:
        # pipeline_mode=pl.Buffered(1) unsupported in this jax build: fall back to the
        # default (double-buffered) specs; everything else unchanged.
        out2d = build(single_buffer_weights=False)(x2d, w1p, b1p, w2p, b2p)

    if M_p != M or dm_p != d_model:
        out2d = out2d[:M, :d_model]
    return out2d.reshape(B, S, d_model)


if __name__ == "__main__":
    def torch_style_init(key, d_in, d_out):
        kw, kb = jax.random.split(key)
        bound = 1.0 / jnp.sqrt(d_in)
        w = jax.random.uniform(kw, (d_in, d_out), jnp.float32, -bound, bound)
        b = jax.random.uniform(kb, (d_out,), jnp.float32, -bound, bound)
        return w, b

    def reference(x, w1, b1, w2, b2):
        h = x @ w1 + b1
        h = jnp.where(h > 0, h, 0.01 * h)  # LeakyReLU(0.01); Dropout(p=0) is identity
        return h @ w2 + b2

    key = jax.random.PRNGKey(0)

    # Case 1: toy shapes implied by the module (batch=2, seq=8, d_model=32, d_forward=64)
    #         -> exercises feature padding to 128 and the single-grid-step path.
    # Case 2: lane-aligned feature dims with a row count that is not a tile multiple
    #         -> exercises the 256-row tile, multi-step grid and row padding.
    cases = [
        (2, 8, 32, 64),
        (2, 300, 128, 256),
    ]
    for B, S, d_model, d_forward in cases:
        key, kx, k1, k2 = jax.random.split(key, 4)
        x = jax.random.normal(kx, (B, S, d_model), dtype=jnp.float32)
        w1, b1 = torch_style_init(k1, d_model, d_forward)
        w2, b2 = torch_style_init(k2, d_forward, d_model)

        out = jax.block_until_ready(atom_feed_forward(x, w1, b1, w2, b2))
        ref = reference(x, w1, b1, w2, b2)
        assert out.shape == (B, S, d_model)
        assert jnp.allclose(out, ref, atol=1e-4, rtol=1e-4), (
            f"mismatch vs reference for shapes {(B, S, d_model, d_forward)}"
        )

    print("KERNEL_OK")
</pallas_src>

<mosaic_0001>
module attributes {stable_mosaic.version = 11 : i64} {
  func.func @_ffn_kernel(%arg0: i32, %arg1: memref<16x128xf32, #tpu.memory_space<vmem>>, %arg2: memref<128x128xf32, #tpu.memory_space<vmem>>, %arg3: memref<1x128xf32, #tpu.memory_space<vmem>>, %arg4: memref<128x128xf32, #tpu.memory_space<vmem>>, %arg5: memref<1x128xf32, #tpu.memory_space<vmem>>, %arg6: memref<16x128xf32, #tpu.memory_space<vmem>>) attributes {dimension_semantics = [#tpu.dimension_semantics<parallel>], iteration_bounds = array<i64: 1>, scalar_prefetch = 0 : i64, scratch_operands = 0 : i64, tpu.core_type = #tpu.core_type<tc>, window_params = [{transform_indices = @transform_0, window_bounds = array<i64: 16, 128>}, {pipeline_mode = #tpu.pipeline_mode<synchronous>, transform_indices = @transform_1, window_bounds = array<i64: 128, 128>}, {pipeline_mode = #tpu.pipeline_mode<synchronous>, transform_indices = @transform_2, window_bounds = array<i64: 1, 128>}, {pipeline_mode = #tpu.pipeline_mode<synchronous>, transform_indices = @transform_3, window_bounds = array<i64: 128, 128>}, {pipeline_mode = #tpu.pipeline_mode<synchronous>, transform_indices = @transform_4, window_bounds = array<i64: 1, 128>}, {transform_indices = @transform_5, window_bounds = array<i64: 16, 128>}]} {
    %c0 = arith.constant 0 : index
    %c0_0 = arith.constant 0 : index
    %0 = vector.load %arg1[%c0, %c0_0] : memref<16x128xf32, #tpu.memory_space<vmem>>, vector<16x128xf32>
    %c0_1 = arith.constant 0 : index
    %c0_2 = arith.constant 0 : index
    %1 = vector.load %arg2[%c0_1, %c0_2] : memref<128x128xf32, #tpu.memory_space<vmem>>, vector<128x128xf32>
    %cst = arith.constant dense<0.000000e+00> : vector<16x128xf32>
    %2 = tpu.matmul %0, %1, %cst {dimension_numbers = #tpu.dot_dimension_numbers<[1], [0], [0], [1], [0, 0, 1, 1], [], []>} : vector<16x128xf32>, vector<128x128xf32>, vector<16x128xf32> -> vector<16x128xf32>
    %c0_3 = arith.constant 0 : index
    %c0_4 = arith.constant 0 : index
    %3 = vector.load %arg3[%c0_3, %c0_4] : memref<1x128xf32, #tpu.memory_space<vmem>>, vector<1x128xf32>
    %4 = vector.broadcast %3 : vector<1x128xf32> to vector<16x128xf32>
    %5 = arith.addf %2, %4 : vector<16x128xf32>
    %cst_5 = arith.constant 0.00999999977 : f32
    %6 = vector.broadcast %cst_5 : f32 to vector<16x128xf32>
    %7 = arith.mulf %6, %5 : vector<16x128xf32>
    %8 = arith.maximumf %5, %7 : vector<16x128xf32>
    %c0_6 = arith.constant 0 : index
    %c0_7 = arith.constant 0 : index
    %9 = vector.load %arg4[%c0_6, %c0_7] : memref<128x128xf32, #tpu.memory_space<vmem>>, vector<128x128xf32>
    %cst_8 = arith.constant dense<0.000000e+00> : vector<16x128xf32>
    %10 = tpu.matmul %8, %9, %cst_8 {dimension_numbers = #tpu.dot_dimension_numbers<[1], [0], [0], [1], [0, 0, 1, 1], [], []>} : vector<16x128xf32>, vector<128x128xf32>, vector<16x128xf32> -> vector<16x128xf32>
    %c0_9 = arith.constant 0 : index
    %c0_10 = arith.constant 0 : index
    %11 = vector.load %arg5[%c0_9, %c0_10] : memref<1x128xf32, #tpu.memory_space<vmem>>, vector<1x128xf32>
    %12 = vector.broadcast %11 : vector<1x128xf32> to vector<16x128xf32>
    %13 = arith.addf %10, %12 : vector<16x128xf32>
    %c0_11 = arith.constant 0 : index
    %c0_12 = arith.constant 0 : index
    %14 = vector.load %arg6[%c0_11, %c0_12] : memref<16x128xf32, #tpu.memory_space<vmem>>, vector<16x128xf32>
    tpu.vector_store %arg6[%c0_11, %c0_12], %13 {strides = array<i32>} : memref<16x128xf32, #tpu.memory_space<vmem>>, vector<16x128xf32>,
    return
  }
  func.func @transform_0(%arg0: i32) -> (i32, i32) {
    %c0_i32 = arith.constant 0 : i32
    %c0_i32_0 = arith.constant 0 : i32
    return %arg0, %c0_i32 : i32, i32
  }
  func.func @transform_1(%arg0: i32) -> (i32, i32) {
    %c0_i32 = arith.constant 0 : i32
    %c0_i32_0 = arith.constant 0 : i32
    %c0_i32_1 = arith.constant 0 : i32
    return %c0_i32, %c0_i32_0 : i32, i32
  }
  func.func @transform_2(%arg0: i32) -> (i32, i32) {
    %c0_i32 = arith.constant 0 : i32
    %c0_i32_0 = arith.constant 0 : i32
    %c0_i32_1 = arith.constant 0 : i32
    return %c0_i32, %c0_i32_0 : i32, i32
  }
  func.func @transform_3(%arg0: i32) -> (i32, i32) {
    %c0_i32 = arith.constant 0 : i32
    %c0_i32_0 = arith.constant 0 : i32
    %c0_i32_1 = arith.constant 0 : i32
    return %c0_i32, %c0_i32_0 : i32, i32
  }
  func.func @transform_4(%arg0: i32) -> (i32, i32) {
    %c0_i32 = arith.constant 0 : i32
    %c0_i32_0 = arith.constant 0 : i32
    %c0_i32_1 = arith.constant 0 : i32
    return %c0_i32, %c0_i32_0 : i32, i32
  }
  func.func @transform_5(%arg0: i32) -> (i32, i32) {
    %c0_i32 = arith.constant 0 : i32
    %c0_i32_0 = arith.constant 0 : i32
    return %arg0, %c0_i32 : i32, i32
  }
}

module attributes {stable_mosaic.version = 11 : i64} {
  func.func @_ffn_kernel(%arg0: i32, %arg1: memref<16x128xf32, #tpu.memory_space<vmem>>, %arg2: memref<128x128xf32, #tpu.memory_space<vmem>>, %arg3: memref<1x128xf32, #tpu.memory_space<vmem>>, %arg4: memref<128x128xf32, #tpu.memory_space<vmem>>, %arg5: memref<1x128xf32, #tpu.memory_space<vmem>>, %arg6: memref<16x128xf32, #tpu.memory_space<vmem>>) attributes {dimension_semantics = [#tpu.dimension_semantics<parallel>], iteration_bounds = array<i64: 1>, scalar_prefetch = 0 : i64, scratch_operands = 0 : i64, tpu.core_type = #tpu.core_type<tc>, window_params = [{transform_indices = @transform_0, window_bounds = array<i64: 16, 128>}, {pipeline_mode = #tpu.pipeline_mode<synchronous>, transform_indices = @transform_1, window_bounds = array<i64: 128, 128>}, {pipeline_mode = #tpu.pipeline_mode<synchronous>, transform_indices = @transform_2, window_bounds = array<i64: 1, 128>}, {pipeline_mode = #tpu.pipeline_mode<synchronous>, transform_indices = @transform_3, window_bounds = array<i64: 128, 128>}, {pipeline_mode = #tpu.pipeline_mode<synchronous>, transform_indices = @transform_4, window_bounds = array<i64: 1, 128>}, {transform_indices = @transform_5, window_bounds = array<i64: 16, 128>}]} {
    %c0 = arith.constant 0 : index
    %c0_0 = arith.constant 0 : index
    %0 = vector.load %arg1[%c0, %c0_0] : memref<16x128xf32, #tpu.memory_space<vmem>>, vector<16x128xf32>
    %c0_1 = arith.constant 0 : index
    %c0_2 = arith.constant 0 : index
    %1 = vector.load %arg2[%c0_1, %c0_2] : memref<128x128xf32, #tpu.memory_space<vmem>>, vector<128x128xf32>
    %cst = arith.constant dense<0.000000e+00> : vector<16x128xf32>
    %2 = tpu.matmul %0, %1, %cst {dimension_numbers = #tpu.dot_dimension_numbers<[1], [0], [0], [1], [0, 0, 1, 1], [], []>} : vector<16x128xf32>, vector<128x128xf32>, vector<16x128xf32> -> vector<16x128xf32>
    %c0_3 = arith.constant 0 : index
    %c0_4 = arith.constant 0 : index
    %3 = vector.load %arg3[%c0_3, %c0_4] : memref<1x128xf32, #tpu.memory_space<vmem>>, vector<1x128xf32>
    %4 = vector.broadcast %3 : vector<1x128xf32> to vector<16x128xf32>
    %5 = arith.addf %2, %4 : vector<16x128xf32>
    %cst_5 = arith.constant 0.00999999977 : f32
    %6 = vector.broadcast %cst_5 : f32 to vector<16x128xf32>
    %7 = arith.mulf %6, %5 : vector<16x128xf32>
    %8 = arith.maximumf %5, %7 : vector<16x128xf32>
    %c0_6 = arith.constant 0 : index
    %c0_7 = arith.constant 0 : index
    %9 = vector.load %arg4[%c0_6, %c0_7] : memref<128x128xf32, #tpu.memory_space<vmem>>, vector<128x128xf32>
    %cst_8 = arith.constant dense<0.000000e+00> : vector<16x128xf32>
    %10 = tpu.matmul %8, %9, %cst_8 {dimension_numbers = #tpu.dot_dimension_numbers<[1], [0], [0], [1], [0, 0, 1, 1], [], []>} : vector<16x128xf32>, vector<128x128xf32>, vector<16x128xf32> -> vector<16x128xf32>
    %c0_9 = arith.constant 0 : index
    %c0_10 = arith.constant 0 : index
    %11 = vector.load %arg5[%c0_9, %c0_10] : memref<1x128xf32, #tpu.memory_space<vmem>>, vector<1x128xf32>
    %12 = vector.broadcast %11 : vector<1x128xf32> to vector<16x128xf32>
    %13 = arith.addf %10, %12 : vector<16x128xf32>
    %c0_11 = arith.constant 0 : index
    %c0_12 = arith.constant 0 : index
    %14 = vector.load %arg6[%c0_11, %c0_12] : memref<16x128xf32, #tpu.memory_space<vmem>>, vector<16x128xf32>
    tpu.vector_store %arg6[%c0_11, %c0_12], %13 {strides = array<i32>} : memref<16x128xf32, #tpu.memory_space<vmem>>, vector<16x128xf32>,
    return
  }
  func.func @transform_0(%arg0: i32) -> (i32, i32) {
    %c0_i32 = arith.constant 0 : i32
    %c0_i32_0 = arith.constant 0 : i32
    return %arg0, %c0_i32 : i32, i32
  }
  func.func @transform_1(%arg0: i32) -> (i32, i32) {
    %c0_i32 = arith.constant 0 : i32
    %c0_i32_0 = arith.constant 0 : i32
    %c0_i32_1 = arith.constant 0 : i32
    return %c0_i32, %c0_i32_0 : i32, i32
  }
  func.func @transform_2(%arg0: i32) -> (i32, i32) {
    %c0_i32 = arith.constant 0 : i32
    %c0_i32_0 = arith.constant 0 : i32
    %c0_i32_1 = arith.constant 0 : i32
    return %c0_i32, %c0_i32_0 : i32, i32
  }
  func.func @transform_3(%arg0: i32) -> (i32, i32) {
    %c0_i32 = arith.constant 0 : i32
    %c0_i32_0 = arith.constant 0 : i32
    %c0_i32_1 = arith.constant 0 : i32
    return %c0_i32, %c0_i32_0 : i32, i32
  }
  func.func @transform_4(%arg0: i32) -> (i32, i32) {
    %c0_i32 = arith.constant 0 : i32
    %c0_i32_0 = arith.constant 0 : i32
    %c0_i32_1 = arith.constant 0 : i32
    return %c0_i32, %c0_i32_0 : i32, i32
  }
  func.func @transform_5(%arg0: i32) -> (i32, i32) {
    %c0_i32 = arith.constant 0 : i32
    %c0_i32_0 = arith.constant 0 : i32
    return %arg0, %c0_i32 : i32, i32
  }
}

</mosaic_0001>

<llo_original>
// kernel: tpu_custom_call.1
$region0: #{tpu_custom_call.1}
  #allocation0 [shape = 'u32[]', space=smem, size = 0x4, offset = 0x4, fixed_abs, tag = 'smem constant byte address 0x4 - core index']
  #allocation1 [shape = 'u32[144,128]{1,0:T(1,128)}', space=vmem, size = 0x12000, scoped, tag = 'internal scratch']
  %s0 = inlined_call_operand.hbm [shape: f32[16,128], index: 0, kind: input, shape index: {}]
  %s1 = inlined_call_operand.hbm [shape: f32[128,128], index: 1, kind: input, shape index: {}]
  %s2 = inlined_call_operand.vmem [shape: f32[1,128], index: 2, kind: input, shape index: {}]
  %s3 = inlined_call_operand.hbm [shape: f32[128,128], index: 3, kind: input, shape index: {}]
  %s4 = inlined_call_operand.vmem [shape: f32[1,128], index: 4, kind: input, shape index: {}]
  %s5 = inlined_call_operand.hbm [shape: f32[16,128], index: 5, kind: output, shape index: {}]
  %s6 = sld [smem:[#allocation0]]
  $region42: #{tpu_custom_call.1} parent=0
    _
  %s8 = ssub.s32 1, %s6
  %s9 = scalar_select 0, %s8, %s6
  $region1: #{tpu_custom_call.1} parent=0
    #allocation2 [shape = 'u8[8192]{0}', space=vmem, size = 0x2000, scoped, tag = 'input window, operand 0, single buffered']
    #allocation3 [shape = 's32[1]{0}', space=sflag, size = 0x4, scoped, tag = 'scoped memory for tpu_custom_call.1']
    #allocation4 [shape = 's32[1]{0}', space=sflag, size = 0x4, scoped, tag = 'scoped memory for tpu_custom_call.1']
    #allocation5 [shape = 'u8[65536]{0}', space=vmem, size = 0x10000, scoped, tag = 'input window, operand 1, single buffered']
    #allocation6 [shape = 's32[1]{0}', space=sflag, size = 0x4, scoped, tag = 'scoped memory for tpu_custom_call.1']
    #allocation7 [shape = 'u8[65536]{0}', space=vmem, size = 0x10000, scoped, tag = 'input window, operand 3, single buffered']
    #allocation8 [shape = 'u8[8192]{0}', space=vmem, size = 0x2000, scoped, tag = 'output window, operand 0, single buffered']
    %10 = vsyncpa [#allocation3], 0
    %11 = vsyncpa [#allocation6], 0
    %12 = vsyncpa [#allocation4], 0
    // Predicated region
    $region2: #{tpu_custom_call.1} parent=1 // pred_check
      _
    $region3: #{tpu_custom_call.1} parent=1 // pred_check_branch
      %14 = sbr.rel (0) target = $region5
    $region4: #{tpu_custom_call.1} parent=1 // pred_region
      %s16 = ssub.s32 256, 256
      %17 = vsyncadd [#allocation3], %s16
      %s18 = sshll.u32 [#allocation2], 4
      %s19 = int_to_ptr.vmem [resolvable:$true] %s18
      %24 = dma.hbm_to_vmem [thread:$0]  %s0, 256, %s19, [#allocation3], 128, 128, 8
    $region5: #{tpu_custom_call.1} parent=1 // pred_fallthru
      _
    // Predicated region
    $region6: #{tpu_custom_call.1} parent=1 // pred_check
      _
    $region7: #{tpu_custom_call.1} parent=1 // pred_check_branch
      %26 = sbr.rel (0) target = $region9
    $region8: #{tpu_custom_call.1} parent=1 // pred_region
      %s28 = ssub.s32 2048, 2048
      %29 = vsyncadd [#allocation6], %s28
      %s30 = sshll.u32 [#allocation5], 4
      %s31 = int_to_ptr.vmem [resolvable:$true] %s30
      %36 = dma.hbm_to_vmem [thread:$0]  %s1, 2048, %s31, [#allocation6], 128, 128, 8
    $region9: #{tpu_custom_call.1} parent=1 // pred_fallthru
      _
    // Predicated region
    $region10: #{tpu_custom_call.1} parent=1 // pred_check
      _
    $region11: #{tpu_custom_call.1} parent=1 // pred_check_branch
      %38 = sbr.rel (0) target = $region13
    $region12: #{tpu_custom_call.1} parent=1 // pred_region
      _
    $region13: #{tpu_custom_call.1} parent=1 // pred_fallthru
      _
    // Predicated region
    $region14: #{tpu_custom_call.1} parent=1 // pred_check
      _
    $region15: #{tpu_custom_call.1} parent=1 // pred_check_branch
      %40 = sbr.rel (0) target = $region17
    $region16: #{tpu_custom_call.1} parent=1 // pred_region
      %s42 = ssub.s32 2048, 2048
      %43 = vsyncadd [#allocation6], %s42
      %s44 = sshll.u32 [#allocation7], 4
      %s45 = int_to_ptr.vmem [resolvable:$true] %s44
      %50 = dma.hbm_to_vmem [thread:$0]  %s3, 2048, %s45, [#allocation6], 128, 128, 8
    $region17: #{tpu_custom_call.1} parent=1 // pred_fallthru
      _
    // Predicated region
    $region18: #{tpu_custom_call.1} parent=1 // pred_check
      _
    $region19: #{tpu_custom_call.1} parent=1 // pred_check_branch
      %52 = sbr.rel (0) target = $region21
    $region20: #{tpu_custom_call.1} parent=1 // pred_region
      _
    $region21: #{tpu_custom_call.1} parent=1 // pred_fallthru
      _
    // Predicated region
    $region22: #{tpu_custom_call.1} parent=1 // pred_check
      _
    $region23: #{tpu_custom_call.1} parent=1 // pred_check_branch
      %54 = sbr.rel (0) target = $region25
    $region24: #{tpu_custom_call.1} parent=1 // pred_region
      %55 = dma.done [#allocation3], 256
    $region25: #{tpu_custom_call.1} parent=1 // pred_fallthru
      _
    // Predicated region
    $region26: #{tpu_custom_call.1} parent=1 // pred_check
      _
    $region27: #{tpu_custom_call.1} parent=1 // pred_check_branch
      %57 = sbr.rel (0) target = $region29
    $region28: #{tpu_custom_call.1} parent=1 // pred_region
      %58 = dma.done [#allocation6], 2048
    $region29: #{tpu_custom_call.1} parent=1 // pred_fallthru
      _
    // Predicated region
    $region30: #{tpu_custom_call.1} parent=1 // pred_check
      _
    $region31: #{tpu_custom_call.1} parent=1 // pred_check_branch
      %60 = sbr.rel (0) target = $region33
    $region32: #{tpu_custom_call.1} parent=1 // pred_region
      %61 = dma.done [#allocation6], 2048
    $region33: #{tpu_custom_call.1} parent=1 // pred_fallthru
      _
    %v62 = vld [vmem:[#allocation2] sm:$0xff]
    %v63 = vld [vmem:[#allocation2 + $0x8] sm:$0xff]
    %v64 = vld [vmem:[#allocation5] sm:$0xff]
    %v65 = vld [vmem:[#allocation5 + $0x8] sm:$0xff]
    %v66 = vld [vmem:[#allocation5 + $0x10] sm:$0xff]
    %v67 = vld [vmem:[#allocation5 + $0x18] sm:$0xff]
    %v68 = vld [vmem:[#allocation5 + $0x20] sm:$0xff]
    %v69 = vld [vmem:[#allocation5 + $0x28] sm:$0xff]
    %v70 = vld [vmem:[#allocation5 + $0x30] sm:$0xff]
    %v71 = vld [vmem:[#allocation5 + $0x38] sm:$0xff]
    %v72 = vld [vmem:[#allocation5 + $0x40] sm:$0xff]
    %v73 = vld [vmem:[#allocation5 + $0x48] sm:$0xff]
    %v74 = vld [vmem:[#allocation5 + $0x50] sm:$0xff]
    %v75 = vld [vmem:[#allocation5 + $0x58] sm:$0xff]
    %v76 = vld [vmem:[#allocation5 + $0x60] sm:$0xff]
    %v77 = vld [vmem:[#allocation5 + $0x68] sm:$0xff]
    %v78 = vld [vmem:[#allocation5 + $0x70] sm:$0xff]
    %v79 = vld [vmem:[#allocation5 + $0x78] sm:$0xff]
    %v80 = vld [vmem:[%s2] sm:$0x1]
    %v82 = vlaneseq
    %v83 = vshrl.u32 %v82, 7
    %v84 = vsub.s32 0, %v83
    %v85 = vrot.slane %v80, %v84
    %87 = vmatprep.subr.mxu0 0.0
    %88 = vmatpush1.msra.mxu0 %v64
    %89 = vmatprep.subr.mxu0 0.0
    %90 = vmatpush1.msra.mxu0 %v65
    %91 = vmatprep.subr.mxu0 0.0
    %92 = vmatpush1.msra.mxu0 %v66
    %93 = vmatprep.subr.mxu0 0.0
    %94 = vmatpush1.msra.mxu0 %v67
    %95 = vmatprep.subr.mxu0 0.0
    %96 = vmatpush1.msra.mxu0 %v68
    %97 = vmatprep.subr.mxu0 0.0
    %98 = vmatpush1.msra.mxu0 %v69
    %99 = vmatprep.subr.mxu0 0.0
    %100 = vmatpush1.msra.mxu0 %v70
    %101 = vmatprep.subr.mxu0 0.0
    %102 = vmatpush1.msra.mxu0 %v71
    %103 = vmatprep.subr.mxu0 0.0
    %104 = vmatpush1.msra.mxu0 %v72
    %105 = vmatprep.subr.mxu0 0.0
    %106 = vmatpush1.msra.mxu0 %v73
    %107 = vmatprep.subr.mxu0 0.0
    %108 = vmatpush1.msra.mxu0 %v74
    %109 = vmatprep.subr.mxu0 0.0
    %110 = vmatpush1.msra.mxu0 %v75
    %111 = vmatprep.subr.mxu0 0.0
    %112 = vmatpush1.msra.mxu0 %v76
    %113 = vmatprep.subr.mxu0 0.0
    %114 = vmatpush1.msra.mxu0 %v77
    %115 = vmatprep.subr.mxu0 0.0
    %116 = vmatpush1.msra.mxu0 %v78
    %117 = vmatprep.subr.mxu0 0.0
    %118 = vmatpush1.msra.mxu0 %v79
    %119 = vmatprep.subr.mxu0 0.0
    %120 = vmatpush1.msra.mxu0 0.0
    %121 = vmatprep.subr.mxu0 0.0
    %122 = vmatpush1.msra.mxu0 0.0
    %123 = vmatprep.subr.mxu0 0.0
    %124 = vmatpush1.msra.mxu0 0.0
    %125 = vmatprep.subr.mxu0 0.0
    %126 = vmatpush1.msra.mxu0 0.0
    %127 = vmatprep.subr.mxu0 0.0
    %128 = vmatpush1.msra.mxu0 0.0
    %129 = vmatprep.subr.mxu0 0.0
    %130 = vmatpush1.msra.mxu0 0.0
    %131 = vmatprep.subr.mxu0 0.0
    %132 = vmatpush1.msra.mxu0 0.0
    %133 = vmatprep.subr.mxu0 0.0
    %134 = vmatpush1.msra.mxu0 0.0
    %135 = vmatprep.subr.mxu0 0.0
    %136 = vmatpush1.msra.mxu0 0.0
    %137 = vmatprep.subr.mxu0 0.0
    %138 = vmatpush1.msra.mxu0 0.0
    %139 = vmatprep.subr.mxu0 0.0
    %140 = vmatpush1.msra.mxu0 0.0
    %141 = vmatprep.subr.mxu0 0.0
    %142 = vmatpush1.msra.mxu0 0.0
    %143 = vmatprep.subr.mxu0 0.0
    %144 = vmatpush1.msra.mxu0 0.0
    %145 = vmatprep.subr.mxu0 0.0
    %146 = vmatpush1.msra.mxu0 0.0
    %147 = vmatprep.subr.mxu0 0.0
    %148 = vmatpush1.msra.mxu0 0.0
    %149 = vmatprep.subr.mxu0 0.0
    %150 = vmatpush1.msra.mxu0 0.0
    %151 = vmatprep.mubr.f32.mxu0 0.0
    %152 = vmatmul.mubr.f32.gmra.mrb[0].mxu0 %v62
    %v153 = vpop.f32.mrb[0].mxu0
    %v154 = vadd.f32 %v85, %v153
    %v155 = vpop.f32.mrb[0].mxu0
    %156 = vmatprep.mubr.f32.mxu0 0.0
    %157 = vmatmul.mubr.f32.gmra.mrb[0].mxu0 %v63
    %v158 = vpop.f32.mrb[0].mxu0
    %v159 = vadd.f32 %v85, %v158
    %v160 = vpop.f32.mrb[0].mxu0
    %161 = vdwg.mxu0
    %v162 = vmul.f32 %v154, 0.01
    %v163 = vmul.f32 %v159, 0.01
    %v164 = vmax.f32 %v154, %v162
    %v165 = vmax.f32 %v159, %v163
    %v166 = vld [vmem:[#allocation7] sm:$0xff]
    %v167 = vld [vmem:[#allocation7 + $0x8] sm:$0xff]
    %v168 = vld [vmem:[#allocation7 + $0x10] sm:$0xff]
    %v169 = vld [vmem:[#allocation7 + $0x18] sm:$0xff]
    %v170 = vld [vmem:[#allocation7 + $0x20] sm:$0xff]
    %v171 = vld [vmem:[#allocation7 + $0x28] sm:$0xff]
    %v172 = vld [vmem:[#allocation7 + $0x30] sm:$0xff]
    %v173 = vld [vmem:[#allocation7 + $0x38] sm:$0xff]
    %v174 = vld [vmem:[#allocation7 + $0x40] sm:$0xff]
    %v175 = vld [vmem:[#allocation7 + $0x48] sm:$0xff]
    %v176 = vld [vmem:[#allocation7 + $0x50] sm:$0xff]
    %v177 = vld [vmem:[#allocation7 + $0x58] sm:$0xff]
    %v178 = vld [vmem:[#allocation7 + $0x60] sm:$0xff]
    %v179 = vld [vmem:[#allocation7 + $0x68] sm:$0xff]
    %v180 = vld [vmem:[#allocation7 + $0x70] sm:$0xff]
    %v181 = vld [vmem:[#allocation7 + $0x78] sm:$0xff]
    %v182 = vld [vmem:[%s4] sm:$0x1]
    %v184 = vlaneseq
    %v185 = vshrl.u32 %v184, 7
    %v186 = vsub.s32 0, %v185
    %v187 = vrot.slane %v182, %v186
    %189 = vmatprep.subr.mxu0 0.0
    %190 = vmatpush1.msra.mxu0 %v166
    %191 = vmatprep.subr.mxu0 0.0
    %192 = vmatpush1.msra.mxu0 %v167
    %193 = vmatprep.subr.mxu0 0.0
    %194 = vmatpush1.msra.mxu0 %v168
    %195 = vmatprep.subr.mxu0 0.0
    %196 = vmatpush1.msra.mxu0 %v169
    %197 = vmatprep.subr.mxu0 0.0
    %198 = vmatpush1.msra.mxu0 %v170
    %199 = vmatprep.subr.mxu0 0.0
    %200 = vmatpush1.msra.mxu0 %v171
    %201 = vmatprep.subr.mxu0 0.0
    %202 = vmatpush1.msra.mxu0 %v172
    %203 = vmatprep.subr.mxu0 0.0
    %204 = vmatpush1.msra.mxu0 %v173
    %205 = vmatprep.subr.mxu0 0.0
    %206 = vmatpush1.msra.mxu0 %v174
    %207 = vmatprep.subr.mxu0 0.0
    %208 = vmatpush1.msra.mxu0 %v175
    %209 = vmatprep.subr.mxu0 0.0
    %210 = vmatpush1.msra.mxu0 %v176
    %211 = vmatprep.subr.mxu0 0.0
    %212 = vmatpush1.msra.mxu0 %v177
    %213 = vmatprep.subr.mxu0 0.0
    %214 = vmatpush1.msra.mxu0 %v178
    %215 = vmatprep.subr.mxu0 0.0
    %216 = vmatpush1.msra.mxu0 %v179
    %217 = vmatprep.subr.mxu0 0.0
    %218 = vmatpush1.msra.mxu0 %v180
    %219 = vmatprep.subr.mxu0 0.0
    %220 = vmatpush1.msra.mxu0 %v181
    %221 = vmatprep.subr.mxu0 0.0
    %222 = vmatpush1.msra.mxu0 0.0
    %223 = vmatprep.subr.mxu0 0.0
    %224 = vmatpush1.msra.mxu0 0.0
    %225 = vmatprep.subr.mxu0 0.0
    %226 = vmatpush1.msra.mxu0 0.0
    %227 = vmatprep.subr.mxu0 0.0
    %228 = vmatpush1.msra.mxu0 0.0
    %229 = vmatprep.subr.mxu0 0.0
    %230 = vmatpush1.msra.mxu0 0.0
    %231 = vmatprep.subr.mxu0 0.0
    %232 = vmatpush1.msra.mxu0 0.0
    %233 = vmatprep.subr.mxu0 0.0
    %234 = vmatpush1.msra.mxu0 0.0
    %235 = vmatprep.subr.mxu0 0.0
    %236 = vmatpush1.msra.mxu0 0.0
    %237 = vmatprep.subr.mxu0 0.0
    %238 = vmatpush1.msra.mxu0 0.0
    %239 = vmatprep.subr.mxu0 0.0
    %240 = vmatpush1.msra.mxu0 0.0
    %241 = vmatprep.subr.mxu0 0.0
    %242 = vmatpush1.msra.mxu0 0.0
    %243 = vmatprep.subr.mxu0 0.0
    %244 = vmatpush1.msra.mxu0 0.0
    %245 = vmatprep.subr.mxu0 0.0
    %246 = vmatpush1.msra.mxu0 0.0
    %247 = vmatprep.subr.mxu0 0.0
    %248 = vmatpush1.msra.mxu0 0.0
    %249 = vmatprep.subr.mxu0 0.0
    %250 = vmatpush1.msra.mxu0 0.0
    %251 = vmatprep.subr.mxu0 0.0
    %252 = vmatpush1.msra.mxu0 0.0
    %253 = vmatprep.mubr.f32.mxu0 0.0
    %254 = vmatmul.mubr.f32.gmra.mrb[0].mxu0 %v164
    %v255 = vpop.f32.mrb[0].mxu0
    %v256 = vadd.f32 %v187, %v255
    %v257 = vpop.f32.mrb[0].mxu0
    %258 = vmatprep.mubr.f32.mxu0 0.0
    %259 = vmatmul.mubr.f32.gmra.mrb[0].mxu0 %v165
    %v260 = vpop.f32.mrb[0].mxu0
    %v261 = vadd.f32 %v187, %v260
    %v262 = vpop.f32.mrb[0].mxu0
    %263 = vdwg.mxu0
    %264 = vst [vmem:[#allocation8] sm:$0xff] %v256
    %265 = vst [vmem:[#allocation8 + $0x8] sm:$0xff] %v261
    // Predicated region
    $region34: #{tpu_custom_call.1} parent=1 // pred_check
      _
    $region35: #{tpu_custom_call.1} parent=1 // pred_check_branch
      %267 = sbr.rel (0) target = $region37
    $region36: #{tpu_custom_call.1} parent=1 // pred_region
      %s269 = ssub.s32 256, 256
      %270 = vsyncadd [#allocation4], %s269
      %s271 = sshll.u32 [#allocation8], 4
      %s272 = int_to_ptr.vmem [resolvable:$true] %s271
      %277 = dma.vmem_to_hbm [thread:$0]  %s272, 256, %s5, [#allocation4], 128, 128, 8
    $region37: #{tpu_custom_call.1} parent=1 // pred_fallthru
      _
    // Predicated region
    $region38: #{tpu_custom_call.1} parent=1 // pred_check
      _
    $region39: #{tpu_custom_call.1} parent=1 // pred_check_branch
      %279 = sbr.rel (0) target = $region41
    $region40: #{tpu_custom_call.1} parent=1 // pred_region
      %280 = dma.done [#allocation4], 256
    $region41: #{tpu_custom_call.1} parent=1 // pred_fallthru
      _
    %281 = vsyncpa [#allocation3], 1
    %282 = vsyncpa [#allocation6], 1
    %283 = vsyncpa [#allocation4], 1

// kernel: tpu_custom_call.1
$region0: #{tpu_custom_call.1}
  #allocation0 [shape = 'u32[]', space=smem, size = 0x4, offset = 0x4, fixed_abs, tag = 'smem constant byte address 0x4 - core index']
  #allocation1 [shape = 'u32[144,128]{1,0:T(1,128)}', space=vmem, size = 0x12000, scoped, tag = 'internal scratch']
  %s0 = inlined_call_operand.hbm [shape: f32[16,128], index: 0, kind: input, shape index: {}]
  %s1 = inlined_call_operand.hbm [shape: f32[128,128], index: 1, kind: input, shape index: {}]
  %s2 = inlined_call_operand.vmem [shape: f32[1,128], index: 2, kind: input, shape index: {}]
  %s3 = inlined_call_operand.hbm [shape: f32[128,128], index: 3, kind: input, shape index: {}]
  %s4 = inlined_call_operand.vmem [shape: f32[1,128], index: 4, kind: input, shape index: {}]
  %s5 = inlined_call_operand.hbm [shape: f32[16,128], index: 5, kind: output, shape index: {}]
  %s6 = sld [smem:[#allocation0]]
  $region42: #{tpu_custom_call.1} parent=0
    _
  %s8 = ssub.s32 1, %s6
  %s9 = scalar_select 0, %s8, %s6
  $region1: #{tpu_custom_call.1} parent=0
    #allocation2 [shape = 'u8[8192]{0}', space=vmem, size = 0x2000, scoped, tag = 'input window, operand 0, single buffered']
    #allocation3 [shape = 's32[1]{0}', space=sflag, size = 0x4, scoped, tag = 'scoped memory for tpu_custom_call.1']
    #allocation4 [shape = 's32[1]{0}', space=sflag, size = 0x4, scoped, tag = 'scoped memory for tpu_custom_call.1']
    #allocation5 [shape = 'u8[65536]{0}', space=vmem, size = 0x10000, scoped, tag = 'input window, operand 1, single buffered']
    #allocation6 [shape = 's32[1]{0}', space=sflag, size = 0x4, scoped, tag = 'scoped memory for tpu_custom_call.1']
    #allocation7 [shape = 'u8[65536]{0}', space=vmem, size = 0x10000, scoped, tag = 'input window, operand 3, single buffered']
    #allocation8 [shape = 'u8[8192]{0}', space=vmem, size = 0x2000, scoped, tag = 'output window, operand 0, single buffered']
    %10 = vsyncpa [#allocation3], 0
    %11 = vsyncpa [#allocation6], 0
    %12 = vsyncpa [#allocation4], 0
    // Predicated region
    $region2: #{tpu_custom_call.1} parent=1 // pred_check
      _
    $region3: #{tpu_custom_call.1} parent=1 // pred_check_branch
      %14 = sbr.rel (0) target = $region5
    $region4: #{tpu_custom_call.1} parent=1 // pred_region
      %s16 = ssub.s32 256, 256
      %17 = vsyncadd [#allocation3], %s16
      %s18 = sshll.u32 [#allocation2], 4
      %s19 = int_to_ptr.vmem [resolvable:$true] %s18
      %24 = dma.hbm_to_vmem [thread:$0]  %s0, 256, %s19, [#allocation3], 128, 128, 8
    $region5: #{tpu_custom_call.1} parent=1 // pred_fallthru
      _
    // Predicated region
    $region6: #{tpu_custom_call.1} parent=1 // pred_check
      _
    $region7: #{tpu_custom_call.1} parent=1 // pred_check_branch
      %26 = sbr.rel (0) target = $region9
    $region8: #{tpu_custom_call.1} parent=1 // pred_region
      %s28 = ssub.s32 2048, 2048
      %29 = vsyncadd [#allocation6], %s28
      %s30 = sshll.u32 [#allocation5], 4
      %s31 = int_to_ptr.vmem [resolvable:$true] %s30
      %36 = dma.hbm_to_vmem [thread:$0]  %s1, 2048, %s31, [#allocation6], 128, 128, 8
    $region9: #{tpu_custom_call.1} parent=1 // pred_fallthru
      _
    // Predicated region
    $region10: #{tpu_custom_call.1} parent=1 // pred_check
      _
    $region11: #{tpu_custom_call.1} parent=1 // pred_check_branch
      %38 = sbr.rel (0) target = $region13
    $region12: #{tpu_custom_call.1} parent=1 // pred_region
      _
    $region13: #{tpu_custom_call.1} parent=1 // pred_fallthru
      _
    // Predicated region
    $region14: #{tpu_custom_call.1} parent=1 // pred_check
      _
    $region15: #{tpu_custom_call.1} parent=1 // pred_check_branch
      %40 = sbr.rel (0) target = $region17
    $region16: #{tpu_custom_call.1} parent=1 // pred_region
      %s42 = ssub.s32 2048, 2048
      %43 = vsyncadd [#allocation6], %s42
      %s44 = sshll.u32 [#allocation7], 4
      %s45 = int_to_ptr.vmem [resolvable:$true] %s44
      %50 = dma.hbm_to_vmem [thread:$0]  %s3, 2048, %s45, [#allocation6], 128, 128, 8
    $region17: #{tpu_custom_call.1} parent=1 // pred_fallthru
      _
    // Predicated region
    $region18: #{tpu_custom_call.1} parent=1 // pred_check
      _
    $region19: #{tpu_custom_call.1} parent=1 // pred_check_branch
      %52 = sbr.rel (0) target = $region21
    $region20: #{tpu_custom_call.1} parent=1 // pred_region
      _
    $region21: #{tpu_custom_call.1} parent=1 // pred_fallthru
      _
    // Predicated region
    $region22: #{tpu_custom_call.1} parent=1 // pred_check
      _
    $region23: #{tpu_custom_call.1} parent=1 // pred_check_branch
      %54 = sbr.rel (0) target = $region25
    $region24: #{tpu_custom_call.1} parent=1 // pred_region
      %55 = dma.done [#allocation3], 256
    $region25: #{tpu_custom_call.1} parent=1 // pred_fallthru
      _
    // Predicated region
    $region26: #{tpu_custom_call.1} parent=1 // pred_check
      _
    $region27: #{tpu_custom_call.1} parent=1 // pred_check_branch
      %57 = sbr.rel (0) target = $region29
    $region28: #{tpu_custom_call.1} parent=1 // pred_region
      %58 = dma.done [#allocation6], 2048
    $region29: #{tpu_custom_call.1} parent=1 // pred_fallthru
      _
    // Predicated region
    $region30: #{tpu_custom_call.1} parent=1 // pred_check
      _
    $region31: #{tpu_custom_call.1} parent=1 // pred_check_branch
      %60 = sbr.rel (0) target = $region33
    $region32: #{tpu_custom_call.1} parent=1 // pred_region
      %61 = dma.done [#allocation6], 2048
    $region33: #{tpu_custom_call.1} parent=1 // pred_fallthru
      _
    %v62 = vld [vmem:[#allocation2] sm:$0xff]
    %v63 = vld [vmem:[#allocation2 + $0x8] sm:$0xff]
    %v64 = vld [vmem:[#allocation5] sm:$0xff]
    %v65 = vld [vmem:[#allocation5 + $0x8] sm:$0xff]
    %v66 = vld [vmem:[#allocation5 + $0x10] sm:$0xff]
    %v67 = vld [vmem:[#allocation5 + $0x18] sm:$0xff]
    %v68 = vld [vmem:[#allocation5 + $0x20] sm:$0xff]
    %v69 = vld [vmem:[#allocation5 + $0x28] sm:$0xff]
    %v70 = vld [vmem:[#allocation5 + $0x30] sm:$0xff]
    %v71 = vld [vmem:[#allocation5 + $0x38] sm:$0xff]
    %v72 = vld [vmem:[#allocation5 + $0x40] sm:$0xff]
    %v73 = vld [vmem:[#allocation5 + $0x48] sm:$0xff]
    %v74 = vld [vmem:[#allocation5 + $0x50] sm:$0xff]
    %v75 = vld [vmem:[#allocation5 + $0x58] sm:$0xff]
    %v76 = vld [vmem:[#allocation5 + $0x60] sm:$0xff]
    %v77 = vld [vmem:[#allocation5 + $0x68] sm:$0xff]
    %v78 = vld [vmem:[#allocation5 + $0x70] sm:$0xff]
    %v79 = vld [vmem:[#allocation5 + $0x78] sm:$0xff]
    %v80 = vld [vmem:[%s2] sm:$0x1]
    %v82 = vlaneseq
    %v83 = vshrl.u32 %v82, 7
    %v84 = vsub.s32 0, %v83
    %v85 = vrot.slane %v80, %v84
    %87 = vmatprep.subr.mxu0 0.0
    %88 = vmatpush1.msra.mxu0 %v64
    %89 = vmatprep.subr.mxu0 0.0
    %90 = vmatpush1.msra.mxu0 %v65
    %91 = vmatprep.subr.mxu0 0.0
    %92 = vmatpush1.msra.mxu0 %v66
    %93 = vmatprep.subr.mxu0 0.0
    %94 = vmatpush1.msra.mxu0 %v67
    %95 = vmatprep.subr.mxu0 0.0
    %96 = vmatpush1.msra.mxu0 %v68
    %97 = vmatprep.subr.mxu0 0.0
    %98 = vmatpush1.msra.mxu0 %v69
    %99 = vmatprep.subr.mxu0 0.0
    %100 = vmatpush1.msra.mxu0 %v70
    %101 = vmatprep.subr.mxu0 0.0
    %102 = vmatpush1.msra.mxu0 %v71
    %103 = vmatprep.subr.mxu0 0.0
    %104 = vmatpush1.msra.mxu0 %v72
    %105 = vmatprep.subr.mxu0 0.0
    %106 = vmatpush1.msra.mxu0 %v73
    %107 = vmatprep.subr.mxu0 0.0
    %108 = vmatpush1.msra.mxu0 %v74
    %109 = vmatprep.subr.mxu0 0.0
    %110 = vmatpush1.msra.mxu0 %v75
    %111 = vmatprep.subr.mxu0 0.0
    %112 = vmatpush1.msra.mxu0 %v76
    %113 = vmatprep.subr.mxu0 0.0
    %114 = vmatpush1.msra.mxu0 %v77
    %115 = vmatprep.subr.mxu0 0.0
    %116 = vmatpush1.msra.mxu0 %v78
    %117 = vmatprep.subr.mxu0 0.0
    %118 = vmatpush1.msra.mxu0 %v79
    %119 = vmatprep.subr.mxu0 0.0
    %120 = vmatpush1.msra.mxu0 0.0
    %121 = vmatprep.subr.mxu0 0.0
    %122 = vmatpush1.msra.mxu0 0.0
    %123 = vmatprep.subr.mxu0 0.0
    %124 = vmatpush1.msra.mxu0 0.0
    %125 = vmatprep.subr.mxu0 0.0
    %126 = vmatpush1.msra.mxu0 0.0
    %127 = vmatprep.subr.mxu0 0.0
    %128 = vmatpush1.msra.mxu0 0.0
    %129 = vmatprep.subr.mxu0 0.0
    %130 = vmatpush1.msra.mxu0 0.0
    %131 = vmatprep.subr.mxu0 0.0
    %132 = vmatpush1.msra.mxu0 0.0
    %133 = vmatprep.subr.mxu0 0.0
    %134 = vmatpush1.msra.mxu0 0.0
    %135 = vmatprep.subr.mxu0 0.0
    %136 = vmatpush1.msra.mxu0 0.0
    %137 = vmatprep.subr.mxu0 0.0
    %138 = vmatpush1.msra.mxu0 0.0
    %139 = vmatprep.subr.mxu0 0.0
    %140 = vmatpush1.msra.mxu0 0.0
    %141 = vmatprep.subr.mxu0 0.0
    %142 = vmatpush1.msra.mxu0 0.0
    %143 = vmatprep.subr.mxu0 0.0
    %144 = vmatpush1.msra.mxu0 0.0
    %145 = vmatprep.subr.mxu0 0.0
    %146 = vmatpush1.msra.mxu0 0.0
    %147 = vmatprep.subr.mxu0 0.0
    %148 = vmatpush1.msra.mxu0 0.0
    %149 = vmatprep.subr.mxu0 0.0
    %150 = vmatpush1.msra.mxu0 0.0
    %151 = vmatprep.mubr.f32.mxu0 0.0
    %152 = vmatmul.mubr.f32.gmra.mrb[0].mxu0 %v62
    %v153 = vpop.f32.mrb[0].mxu0
    %v154 = vadd.f32 %v85, %v153
    %v155 = vpop.f32.mrb[0].mxu0
    %156 = vmatprep.mubr.f32.mxu0 0.0
    %157 = vmatmul.mubr.f32.gmra.mrb[0].mxu0 %v63
    %v158 = vpop.f32.mrb[0].mxu0
    %v159 = vadd.f32 %v85, %v158
    %v160 = vpop.f32.mrb[0].mxu0
    %161 = vdwg.mxu0
    %v162 = vmul.f32 %v154, 0.01
    %v163 = vmul.f32 %v159, 0.01
    %v164 = vmax.f32 %v154, %v162
    %v165 = vmax.f32 %v159, %v163
    %v166 = vld [vmem:[#allocation7] sm:$0xff]
    %v167 = vld [vmem:[#allocation7 + $0x8] sm:$0xff]
    %v168 = vld [vmem:[#allocation7 + $0x10] sm:$0xff]
    %v169 = vld [vmem:[#allocation7 + $0x18] sm:$0xff]
    %v170 = vld [vmem:[#allocation7 + $0x20] sm:$0xff]
    %v171 = vld [vmem:[#allocation7 + $0x28] sm:$0xff]
    %v172 = vld [vmem:[#allocation7 + $0x30] sm:$0xff]
    %v173 = vld [vmem:[#allocation7 + $0x38] sm:$0xff]
    %v174 = vld [vmem:[#allocation7 + $0x40] sm:$0xff]
    %v175 = vld [vmem:[#allocation7 + $0x48] sm:$0xff]
    %v176 = vld [vmem:[#allocation7 + $0x50] sm:$0xff]
    %v177 = vld [vmem:[#allocation7 + $0x58] sm:$0xff]
    %v178 = vld [vmem:[#allocation7 + $0x60] sm:$0xff]
    %v179 = vld [vmem:[#allocation7 + $0x68] sm:$0xff]
    %v180 = vld [vmem:[#allocation7 + $0x70] sm:$0xff]
    %v181 = vld [vmem:[#allocation7 + $0x78] sm:$0xff]
    %v182 = vld [vmem:[%s4] sm:$0x1]
    %v184 = vlaneseq
    %v185 = vshrl.u32 %v184, 7
    %v186 = vsub.s32 0, %v185
    %v187 = vrot.slane %v182, %v186
    %189 = vmatprep.subr.mxu0 0.0
    %190 = vmatpush1.msra.mxu0 %v166
    %191 = vmatprep.subr.mxu0 0.0
    %192 = vmatpush1.msra.mxu0 %v167
    %193 = vmatprep.subr.mxu0 0.0
    %194 = vmatpush1.msra.mxu0 %v168
    %195 = vmatprep.subr.mxu0 0.0
    %196 = vmatpush1.msra.mxu0 %v169
    %197 = vmatprep.subr.mxu0 0.0
    %198 = vmatpush1.msra.mxu0 %v170
    %199 = vmatprep.subr.mxu0 0.0
    %200 = vmatpush1.msra.mxu0 %v171
    %201 = vmatprep.subr.mxu0 0.0
    %202 = vmatpush1.msra.mxu0 %v172
    %203 = vmatprep.subr.mxu0 0.0
    %204 = vmatpush1.msra.mxu0 %v173
    %205 = vmatprep.subr.mxu0 0.0
    %206 = vmatpush1.msra.mxu0 %v174
    %207 = vmatprep.subr.mxu0 0.0
    %208 = vmatpush1.msra.mxu0 %v175
    %209 = vmatprep.subr.mxu0 0.0
    %210 = vmatpush1.msra.mxu0 %v176
    %211 = vmatprep.subr.mxu0 0.0
    %212 = vmatpush1.msra.mxu0 %v177
    %213 = vmatprep.subr.mxu0 0.0
    %214 = vmatpush1.msra.mxu0 %v178
    %215 = vmatprep.subr.mxu0 0.0
    %216 = vmatpush1.msra.mxu0 %v179
    %217 = vmatprep.subr.mxu0 0.0
    %218 = vmatpush1.msra.mxu0 %v180
    %219 = vmatprep.subr.mxu0 0.0
    %220 = vmatpush1.msra.mxu0 %v181
    %221 = vmatprep.subr.mxu0 0.0
    %222 = vmatpush1.msra.mxu0 0.0
    %223 = vmatprep.subr.mxu0 0.0
    %224 = vmatpush1.msra.mxu0 0.0
    %225 = vmatprep.subr.mxu0 0.0
    %226 = vmatpush1.msra.mxu0 0.0
    %227 = vmatprep.subr.mxu0 0.0
    %228 = vmatpush1.msra.mxu0 0.0
    %229 = vmatprep.subr.mxu0 0.0
    %230 = vmatpush1.msra.mxu0 0.0
    %231 = vmatprep.subr.mxu0 0.0
    %232 = vmatpush1.msra.mxu0 0.0
    %233 = vmatprep.subr.mxu0 0.0
    %234 = vmatpush1.msra.mxu0 0.0
    %235 = vmatprep.subr.mxu0 0.0
    %236 = vmatpush1.msra.mxu0 0.0
    %237 = vmatprep.subr.mxu0 0.0
    %238 = vmatpush1.msra.mxu0 0.0
    %239 = vmatprep.subr.mxu0 0.0
    %240 = vmatpush1.msra.mxu0 0.0
    %241 = vmatprep.subr.mxu0 0.0
    %242 = vmatpush1.msra.mxu0 0.0
    %243 = vmatprep.subr.mxu0 0.0
    %244 = vmatpush1.msra.mxu0 0.0
    %245 = vmatprep.subr.mxu0 0.0
    %246 = vmatpush1.msra.mxu0 0.0
    %247 = vmatprep.subr.mxu0 0.0
    %248 = vmatpush1.msra.mxu0 0.0
    %249 = vmatprep.subr.mxu0 0.0
    %250 = vmatpush1.msra.mxu0 0.0
    %251 = vmatprep.subr.mxu0 0.0
    %252 = vmatpush1.msra.mxu0 0.0
    %253 = vmatprep.mubr.f32.mxu0 0.0
    %254 = vmatmul.mubr.f32.gmra.mrb[0].mxu0 %v164
    %v255 = vpop.f32.mrb[0].mxu0
    %v256 = vadd.f32 %v187, %v255
    %v257 = vpop.f32.mrb[0].mxu0
    %258 = vmatprep.mubr.f32.mxu0 0.0
    %259 = vmatmul.mubr.f32.gmra.mrb[0].mxu0 %v165
    %v260 = vpop.f32.mrb[0].mxu0
    %v261 = vadd.f32 %v187, %v260
    %v262 = vpop.f32.mrb[0].mxu0
    %263 = vdwg.mxu0
    %264 = vst [vmem:[#allocation8] sm:$0xff] %v256
    %265 = vst [vmem:[#allocation8 + $0x8] sm:$0xff] %v261
    // Predicated region
    $region34: #{tpu_custom_call.1} parent=1 // pred_check
      _
    $region35: #{tpu_custom_call.1} parent=1 // pred_check_branch
      %267 = sbr.rel (0) target = $region37
    $region36: #{tpu_custom_call.1} parent=1 // pred_region
      %s269 = ssub.s32 256, 256
      %270 = vsyncadd [#allocation4], %s269
      %s271 = sshll.u32 [#allocation8], 4
      %s272 = int_to_ptr.vmem [resolvable:$true] %s271
      %277 = dma.vmem_to_hbm [thread:$0]  %s272, 256, %s5, [#allocation4], 128, 128, 8
    $region37: #{tpu_custom_call.1} parent=1 // pred_fallthru
      _
    // Predicated region
    $region38: #{tpu_custom_call.1} parent=1 // pred_check
      _
    $region39: #{tpu_custom_call.1} parent=1 // pred_check_branch
      %279 = sbr.rel (0) target = $region41
    $region40: #{tpu_custom_call.1} parent=1 // pred_region
      %280 = dma.done [#allocation4], 256
    $region41: #{tpu_custom_call.1} parent=1 // pred_fallthru
      _
    %281 = vsyncpa [#allocation3], 1
    %282 = vsyncpa [#allocation6], 1
    %283 = vsyncpa [#allocation4], 1

</llo_original>
